<compile_context>
chip_gen: v6e
topology: v6e:2x2x1
jax: 0.10.0
libtpu: 0.0.40
codegen_flags: <defaults>
</compile_context>

<pallas_src>
import functools

import jax
import jax.numpy as jnp
from jax.experimental import pallas as pl
from jax.experimental.pallas import tpu as pltpu


def _vmem_limit_bytes():
    """Generation-aware scoped-VMEM budget with headroom below physical capacity."""
    cap = 128 * 1024 * 1024
    try:
        cap = int(pltpu.get_tpu_info().vmem_capacity_bytes)
    except Exception:
        pass
    return max(32 * 1024 * 1024, min((cap * 3) // 4, 100 * 1024 * 1024))


def _layernorm(h, w, b, eps=1e-5):
    mu = jnp.mean(h, axis=-1, keepdims=True)
    var = jnp.mean((h - mu) ** 2, axis=-1, keepdims=True)
    return (h - mu) * jax.lax.rsqrt(var + eps) * w + b


# ---------------------------------------------------------------------------
# Kernel 1: LN1 + full-width Q/K/V projections (weights streamed per projection)
# grid = (B, seq_tiles, 3)  -- axis 2 selects q / k / v.
# ---------------------------------------------------------------------------
def ln_qkv_kernel(x_ref, ln1_ref, w_ref, b_ref, qkv_ref, h_sc):
    p = pl.program_id(2)

    @pl.when(p == 0)
    def _():
        x = x_ref[0].astype(jnp.float32)                 # (ts, D)
        ln1 = ln1_ref[...]                               # (2, D): [gamma; beta]
        h = _layernorm(x, ln1[0:1, :], ln1[1:2, :])
        h_sc[...] = h.astype(h_sc.dtype)                 # cache LN'd activations

    y = jnp.dot(h_sc[...], w_ref[0],
                preferred_element_type=jnp.float32) + b_ref[0]       # (ts, D) f32
    qkv_ref[0, 0] = y.astype(qkv_ref.dtype)


# ---------------------------------------------------------------------------
# Kernel 2: grouped flash attention + out-projection + residual
# grid = (B, q_tiles, head_groups, kv_tiles); last two axes are reductions.
# ---------------------------------------------------------------------------
def attn_kernel(x_ref, q_ref, k_ref, v_ref, wo_ref, bo_ref, o_ref,
                m_sc, l_sc, acc_sc, proj_sc, *, group_size, head_dim):
    hg = pl.program_id(2)
    ki = pl.program_id(3)
    num_hg = pl.num_programs(2)
    num_k = pl.num_programs(3)

    # Reset flash state at the first kv tile of every (batch, q-tile, head-group).
    @pl.when(ki == 0)
    def _():
        m_sc[...] = jnp.full(m_sc.shape, -jnp.inf, jnp.float32)
        l_sc[...] = jnp.zeros(l_sc.shape, jnp.float32)
        acc_sc[...] = jnp.zeros(acc_sc.shape, jnp.float32)

    # Reset the out-projection accumulator once per (batch, q-tile).
    @pl.when(jnp.logical_and(hg == 0, ki == 0))
    def _():
        proj_sc[...] = jnp.zeros(proj_sc.shape, jnp.float32)

    q = q_ref[0, 0]                                      # (tq, G*hd) bf16, pre-scaled
    k = k_ref[0, 0]                                      # (tk, G*hd) bf16
    v = v_ref[0, 0]                                      # (tk, G*hd) bf16

    # Per-head flash update within the group (G is small -> static unroll keeps
    # lane offsets static; acc for head g lives at lanes [g*hd, (g+1)*hd) ).
    for g in range(group_size):
        lo = g * head_dim
        sl = pl.ds(lo, head_dim)
        qg = q[:, lo:lo + head_dim]
        kg = k[:, lo:lo + head_dim]
        vg = v[:, lo:lo + head_dim]
        s = jax.lax.dot_general(qg, kg, (((1,), (1,)), ((), ())),
                                preferred_element_type=jnp.float32)   # (tq, tk)
        m_prev = m_sc[g]                                               # (tq, 1)
        m_new = jnp.maximum(m_prev, jnp.max(s, axis=-1, keepdims=True))
        alpha = jnp.exp(m_prev - m_new)
        p = jnp.exp(s - m_new)
        l_sc[g] = alpha * l_sc[g] + jnp.sum(p, axis=-1, keepdims=True)
        pv = jnp.dot(p.astype(vg.dtype), vg,
                     preferred_element_type=jnp.float32)               # (tq, hd)
        acc_sc[:, sl] = alpha * acc_sc[:, sl] + pv
        m_sc[g] = m_new

    # After the last kv tile: normalize the group's heads (concatenated along
    # lanes) and fold them through the streamed (G*hd, D) out-proj slab.
    @pl.when(ki == num_k - 1)
    def _():
        for g in range(group_size):
            sl = pl.ds(g * head_dim, head_dim)
            acc_sc[:, sl] = acc_sc[:, sl] * (1.0 / l_sc[g])
        proj_sc[...] += jnp.dot(acc_sc[...].astype(wo_ref.dtype), wo_ref[...],
                                preferred_element_type=jnp.float32)

    # After the last head group's last kv tile: residual and write x1.
    @pl.when(jnp.logical_and(hg == num_hg - 1, ki == num_k - 1))
    def _():
        x = x_ref[0].astype(jnp.float32)                 # (tq, D)
        o_ref[0] = (x + proj_sc[...] + bo_ref[...]).astype(o_ref.dtype)


# ---------------------------------------------------------------------------
# Kernel 3: LN2 + MLP + residual with the hidden dimension streamed on the grid.
# grid = (B, seq_tiles, hidden_chunks); last axis is a reduction.
# ---------------------------------------------------------------------------
def ln_mlp_kernel(x_ref, ln2_ref, w1_ref, b1_ref, w2_ref, b2_ref, o_ref,
                  h_sc, acc_sc):
    c = pl.program_id(2)
    num_c = pl.num_programs(2)

    @pl.when(c == 0)
    def _():
        x = x_ref[0].astype(jnp.float32)                 # (ts, D)
        ln2 = ln2_ref[...]
        h = _layernorm(x, ln2[0:1, :], ln2[1:2, :])
        h_sc[...] = h.astype(h_sc.dtype)
        acc_sc[...] = jnp.zeros(acc_sc.shape, jnp.float32)

    f = jnp.dot(h_sc[...], w1_ref[...],
                preferred_element_type=jnp.float32) + b1_ref[...]     # (ts, hc)
    f = jnp.maximum(f, 0.0)
    acc_sc[...] += jnp.dot(f.astype(w2_ref.dtype), w2_ref[...],
                           preferred_element_type=jnp.float32)        # (ts, D)

    @pl.when(c == num_c - 1)
    def _():
        x = x_ref[0].astype(jnp.float32)
        o_ref[0] = (x + acc_sc[...] + b2_ref[...]).astype(o_ref.dtype)


# ---------------------------------------------------------------------------
# Wrapper
# ---------------------------------------------------------------------------
def _pick_tile(n, target):
    if n <= target:
        return n
    for t in range(target, 7, -8):
        if n % t == 0:
            return t
    return n


def _pick_group(num_heads, head_dim, dim, target=256):
    """Largest head-group size whose lane width is 128-aligned (or the full dim)."""
    valid = [g for g in range(1, num_heads + 1)
             if num_heads % g == 0
             and ((g * head_dim) % 128 == 0 or g * head_dim == dim)]
    preferred = [g for g in valid if g * head_dim <= target]
    return max(preferred) if preferred else min(valid)


def transformer_block(x, params, num_heads, *, seq_tile=None, q_tile=None,
                      kv_tile=None, group_size=None, hidden_chunk=None,
                      compute_dtype=jnp.bfloat16):
    """Forward pass of the PyTorch TransformerBlock (pre-LN, unmasked attention)."""
    B, S, D = x.shape
    assert D % num_heads == 0, "dim must be divisible by num_heads"
    hd = D // num_heads
    hidden = params["w1"].shape[1]
    scale = 1.0 / float(hd) ** 0.5

    ts = seq_tile or _pick_tile(S, 256)
    tq = q_tile or _pick_tile(S, 256)
    tk = kv_tile or _pick_tile(S, 512)
    G = group_size or _pick_group(num_heads, hd, D)
    GH = G * hd
    hc = hidden_chunk or _pick_tile(hidden, 512)
    assert S % ts == 0 and S % tq == 0 and S % tk == 0
    assert num_heads % G == 0 and D % GH == 0
    assert hidden % hc == 0
    vmem = _vmem_limit_bytes()

    # ---- parameter prep (plain XLA; conceptually one-time) ----
    ln1 = jnp.concatenate([params["ln1_w"], params["ln1_b"]], axis=0)   # (2, D)
    ln2 = jnp.concatenate([params["ln2_w"], params["ln2_b"]], axis=0)   # (2, D)
    # Fold the 1/sqrt(hd) attention scale into the Q projection; stack Q/K/V.
    wqkv = jnp.stack([params["wq"] * scale, params["wk"], params["wv"]]
                     ).astype(compute_dtype)                            # (3, D, D)
    bqkv = jnp.stack([params["bq"] * scale, params["bk"], params["bv"]])  # (3, 1, D)
    wo = params["wo"].astype(compute_dtype)                             # (D, D)
    bo = params["bo"]
    w1 = params["w1"].astype(compute_dtype)
    b1 = params["b1"]
    w2 = params["w2"].astype(compute_dtype)
    b2 = params["b2"]

    # ---- kernel 1: LN1 + Q/K/V projections -> (3, B, S, D) bf16 ----
    qkv = pl.pallas_call(
        ln_qkv_kernel,
        out_shape=jax.ShapeDtypeStruct((3, B, S, D), compute_dtype),
        grid=(B, S // ts, 3),
        in_specs=[
            pl.BlockSpec((1, ts, D), lambda b, si, p: (b, si, 0)),
            pl.BlockSpec((2, D), lambda b, si, p: (0, 0)),
            pl.BlockSpec((1, D, D), lambda b, si, p: (p, 0, 0)),
            pl.BlockSpec((1, 1, D), lambda b, si, p: (p, 0, 0)),
        ],
        out_specs=pl.BlockSpec((1, 1, ts, D), lambda b, si, p: (p, b, si, 0)),
        scratch_shapes=[pltpu.VMEM((ts, D), compute_dtype)],
        compiler_params=pltpu.CompilerParams(
            dimension_semantics=("parallel", "parallel", "arbitrary"),
            vmem_limit_bytes=vmem),
    )(x, ln1, wqkv, bqkv)

    # ---- kernel 2: grouped flash attention + out-proj + residual ----
    kernel2 = functools.partial(attn_kernel, group_size=G, head_dim=hd)
    x1 = pl.pallas_call(
        kernel2,
        out_shape=jax.ShapeDtypeStruct((B, S, D), x.dtype),
        grid=(B, S // tq, num_heads // G, S // tk),
        in_specs=[
            pl.BlockSpec((1, tq, D), lambda b, qi, hg, ki: (b, qi, 0)),          # x
            pl.BlockSpec((1, 1, tq, GH), lambda b, qi, hg, ki: (0, b, qi, hg)),  # q
            pl.BlockSpec((1, 1, tk, GH), lambda b, qi, hg, ki: (1, b, ki, hg)),  # k
            pl.BlockSpec((1, 1, tk, GH), lambda b, qi, hg, ki: (2, b, ki, hg)),  # v
            pl.BlockSpec((GH, D), lambda b, qi, hg, ki: (hg, 0)),                # wo
            pl.BlockSpec((1, D), lambda b, qi, hg, ki: (0, 0)),                  # bo
        ],
        out_specs=pl.BlockSpec((1, tq, D), lambda b, qi, hg, ki: (b, qi, 0)),
        scratch_shapes=[
            pltpu.VMEM((G, tq, 1), jnp.float32),   # running max  m (per head)
            pltpu.VMEM((G, tq, 1), jnp.float32),   # running sum  l (per head)
            pltpu.VMEM((tq, GH), jnp.float32),     # group attention accumulator
            pltpu.VMEM((tq, D), jnp.float32),      # out-projection accumulator
        ],
        compiler_params=pltpu.CompilerParams(
            dimension_semantics=("parallel", "parallel", "arbitrary", "arbitrary"),
            vmem_limit_bytes=vmem),
    )(x, qkv, qkv, qkv, wo, bo)

    # ---- kernel 3: LN2 + MLP (hidden-dim streamed) + residual ----
    out = pl.pallas_call(
        ln_mlp_kernel,
        out_shape=jax.ShapeDtypeStruct((B, S, D), x.dtype),
        grid=(B, S // ts, hidden // hc),
        in_specs=[
            pl.BlockSpec((1, ts, D), lambda b, si, c: (b, si, 0)),
            pl.BlockSpec((2, D), lambda b, si, c: (0, 0)),
            pl.BlockSpec((D, hc), lambda b, si, c: (0, c)),
            pl.BlockSpec((1, hc), lambda b, si, c: (0, c)),
            pl.BlockSpec((hc, D), lambda b, si, c: (c, 0)),
            pl.BlockSpec((1, D), lambda b, si, c: (0, 0)),
        ],
        out_specs=pl.BlockSpec((1, ts, D), lambda b, si, c: (b, si, 0)),
        scratch_shapes=[pltpu.VMEM((ts, D), compute_dtype),
                        pltpu.VMEM((ts, D), jnp.float32)],
        compiler_params=pltpu.CompilerParams(
            dimension_semantics=("parallel", "parallel", "arbitrary"),
            vmem_limit_bytes=vmem),
    )(x1, ln2, w1, b1, w2, b2)
    return out


# ---------------------------------------------------------------------------
# Params, pure-JAX reference, test
# ---------------------------------------------------------------------------
def init_params(key, dim):
    ks = jax.random.split(key, 12)

    def lin(kw, kb, fan_in, fan_out):
        w = jax.random.normal(kw, (fan_in, fan_out), jnp.float32) * 0.02
        b = jax.random.normal(kb, (1, fan_out), jnp.float32) * 0.01
        return w, b

    wq, bq = lin(ks[0], ks[1], dim, dim)
    wk, bk = lin(ks[2], ks[3], dim, dim)
    wv, bv = lin(ks[4], ks[5], dim, dim)
    wo, bo = lin(ks[6], ks[7], dim, dim)
    w1, b1 = lin(ks[8], ks[9], dim, 4 * dim)
    w2, b2 = lin(ks[10], ks[11], 4 * dim, dim)
    return {
        "ln1_w": jnp.ones((1, dim), jnp.float32),
        "ln1_b": jnp.zeros((1, dim), jnp.float32),
        "wq": wq, "bq": bq, "wk": wk, "bk": bk, "wv": wv, "bv": bv,
        "wo": wo, "bo": bo,
        "ln2_w": jnp.ones((1, dim), jnp.float32),
        "ln2_b": jnp.zeros((1, dim), jnp.float32),
        "w1": w1, "b1": b1, "w2": w2, "b2": b2,
    }


def reference_block(x, p, num_heads):
    """Pure-JAX f32 reference matching the PyTorch forward semantics."""
    B, S, D = x.shape
    hd = D // num_heads

    def ln(h, w, b):
        mu = jnp.mean(h, -1, keepdims=True)
        var = jnp.mean((h - mu) ** 2, -1, keepdims=True)
        return (h - mu) * jax.lax.rsqrt(var + 1e-5) * w + b

    h = ln(x, p["ln1_w"], p["ln1_b"])
    q = h @ p["wq"] + p["bq"]
    k = h @ p["wk"] + p["bk"]
    v = h @ p["wv"] + p["bv"]
    q = q.reshape(B, S, num_heads, hd).transpose(0, 2, 1, 3)
    k = k.reshape(B, S, num_heads, hd).transpose(0, 2, 1, 3)
    v = v.reshape(B, S, num_heads, hd).transpose(0, 2, 1, 3)
    s = (q @ k.transpose(0, 1, 3, 2)) / jnp.sqrt(jnp.float32(hd))
    p_attn = jax.nn.softmax(s, axis=-1)
    o = (p_attn @ v).transpose(0, 2, 1, 3).reshape(B, S, D)
    x1 = x + (o @ p["wo"] + p["bo"])
    h2 = ln(x1, p["ln2_w"], p["ln2_b"])
    f = jnp.maximum(h2 @ p["w1"] + p["b1"], 0.0)
    return x1 + (f @ p["w2"] + p["b2"])


if __name__ == "__main__":
    def run_case(B, S, D, H, **kw):
        key = jax.random.PRNGKey(0)
        kx, kp = jax.random.split(key)
        x = jax.random.normal(kx, (B, S, D), jnp.float32)
        params = init_params(kp, D)
        out = transformer_block(x, params, H, **kw)
        out = jax.block_until_ready(out)
        ref = reference_block(x, params, H)
        assert out.shape == (B, S, D)
        err = float(jnp.max(jnp.abs(out - ref)))
        # bf16 matmul operands -> loose tolerance vs f32 reference.
        assert jnp.allclose(out, ref, rtol=2e-2, atol=2e-2), f"max abs diff {err}"

    # Small config: multiple q/kv tiles exercise online-softmax accumulation.
    run_case(2, 16, 32, 8, seq_tile=8, q_tile=8, kv_tile=8)
    # Slightly larger config: multiple head groups and multiple MLP hidden chunks.
    run_case(2, 32, 256, 4, seq_tile=16, q_tile=16, kv_tile=16,
             group_size=2, hidden_chunk=512)

    print("KERNEL_OK")
</pallas_src>

<mosaic_0001>
module attributes {stable_mosaic.version = 11 : i64} {
  func.func @ln_qkv_kernel(%arg0: i32, %arg1: i32, %arg2: i32, %arg3: memref<1x8x32xf32, #tpu.memory_space<vmem>>, %arg4: memref<2x32xf32, #tpu.memory_space<vmem>>, %arg5: memref<1x32x32xbf16, #tpu.memory_space<vmem>>, %arg6: memref<1x1x32xf32, #tpu.memory_space<vmem>>, %arg7: memref<1x1x8x32xbf16, #tpu.memory_space<vmem>>, %arg8: memref<8x32xbf16, #tpu.memory_space<vmem>>) attributes {dimension_semantics = [#tpu.dimension_semantics<parallel>, #tpu.dimension_semantics<parallel>, #tpu.dimension_semantics<arbitrary>], iteration_bounds = array<i64: 2, 2, 3>, scalar_prefetch = 0 : i64, scratch_operands = 1 : i64, tpu.core_type = #tpu.core_type<tc>, window_params = [{transform_indices = @transform_0, window_bounds = array<i64: 1, 8, 32>}, {pipeline_mode = #tpu.pipeline_mode<synchronous>, transform_indices = @transform_1, window_bounds = array<i64: 2, 32>}, {transform_indices = @transform_2, window_bounds = array<i64: 1, 32, 32>}, {transform_indices = @transform_3, window_bounds = array<i64: 1, 1, 32>}, {transform_indices = @transform_4, window_bounds = array<i64: 1, 1, 8, 32>}]} {
    %c0_i32 = arith.constant 0 : i32
    %0 = arith.cmpi eq, %arg2, %c0_i32 : i32
    %1 = arith.extui %0 : i1 to i32
    %c0_i32_0 = arith.constant 0 : i32
    %2 = arith.cmpi ne, %1, %c0_i32_0 : i32
    scf.if %2 {
      %c0_12 = arith.constant 0 : index
      %c0_13 = arith.constant 0 : index
      %c0_14 = arith.constant 0 : index
      %15 = vector.load %arg3[%c0_12, %c0_13, %c0_14] : memref<1x8x32xf32, #tpu.memory_space<vmem>>, vector<1x8x32xf32>
      %16 = vector.shape_cast %15 : vector<1x8x32xf32> to vector<8x32xf32>
      %c0_15 = arith.constant 0 : index
      %c0_16 = arith.constant 0 : index
      %17 = vector.load %arg4[%c0_15, %c0_16] : memref<2x32xf32, #tpu.memory_space<vmem>>, vector<2x32xf32>
      %18 = vector.extract_strided_slice %17 {offsets = [0, 0], sizes = [1, 32], strides = [1, 1]} : vector<2x32xf32> to vector<1x32xf32>
      %19 = vector.extract_strided_slice %17 {offsets = [1, 0], sizes = [1, 32], strides = [1, 1]} : vector<2x32xf32> to vector<1x32xf32>
      %cst_17 = arith.constant dense<0.000000e+00> : vector<8xf32>
      %20 = vector.multi_reduction <add>, %16, %cst_17 [1] : vector<8x32xf32> to vector<8xf32>
      %21 = vector.shape_cast %20 : vector<8xf32> to vector<8x1xf32>
      %cst_18 = arith.constant 3.200000e+01 : f32
      %22 = vector.broadcast %cst_18 : f32 to vector<8x1xf32>
      %23 = arith.divf %21, %22 : vector<8x1xf32>
      %24 = vector.broadcast %23 : vector<8x1xf32> to vector<8x32xf32>
      %25 = arith.subf %16, %24 : vector<8x32xf32>
      %26 = arith.mulf %25, %25 : vector<8x32xf32>
      %cst_19 = arith.constant dense<0.000000e+00> : vector<8xf32>
      %27 = vector.multi_reduction <add>, %26, %cst_19 [1] : vector<8x32xf32> to vector<8xf32>
      %28 = vector.shape_cast %27 : vector<8xf32> to vector<8x1xf32>
      %cst_20 = arith.constant 3.200000e+01 : f32
      %29 = vector.broadcast %cst_20 : f32 to vector<8x1xf32>
      %30 = arith.divf %28, %29 : vector<8x1xf32>
      %31 = vector.broadcast %23 : vector<8x1xf32> to vector<8x32xf32>
      %32 = arith.subf %16, %31 : vector<8x32xf32>
      %cst_21 = arith.constant 9.99999974E-6 : f32
      %33 = vector.broadcast %cst_21 : f32 to vector<8x1xf32>
      %34 = arith.addf %30, %33 : vector<8x1xf32>
      %35 = math.rsqrt %34 : vector<8x1xf32>
      %36 = vector.broadcast %35 : vector<8x1xf32> to vector<8x32xf32>
      %37 = arith.mulf %32, %36 : vector<8x32xf32>
      %38 = vector.broadcast %18 : vector<1x32xf32> to vector<8x32xf32>
      %39 = arith.mulf %37, %38 : vector<8x32xf32>
      %40 = vector.broadcast %19 : vector<1x32xf32> to vector<8x32xf32>
      %41 = arith.addf %39, %40 : vector<8x32xf32>
      %42 = arith.truncf %41 : vector<8x32xf32> to vector<8x32xbf16>
      %c0_22 = arith.constant 0 : index
      %c0_23 = arith.constant 0 : index
      %43 = vector.load %arg8[%c0_22, %c0_23] : memref<8x32xbf16, #tpu.memory_space<vmem>>, vector<8x32xbf16>
      tpu.vector_store %arg8[%c0_22, %c0_23], %42 {strides = array<i32>} : memref<8x32xbf16, #tpu.memory_space<vmem>>, vector<8x32xbf16>,
    } else {
    }
    %c0 = arith.constant 0 : index
    %c0_1 = arith.constant 0 : index
    %3 = vector.load %arg8[%c0, %c0_1] : memref<8x32xbf16, #tpu.memory_space<vmem>>, vector<8x32xbf16>
    %c0_2 = arith.constant 0 : index
    %c0_3 = arith.constant 0 : index
    %c0_4 = arith.constant 0 : index
    %4 = vector.load %arg5[%c0_2, %c0_3, %c0_4] : memref<1x32x32xbf16, #tpu.memory_space<vmem>>, vector<1x32x32xbf16>
    %5 = vector.shape_cast %4 : vector<1x32x32xbf16> to vector<32x32xbf16>
    %cst = arith.constant dense<0.000000e+00> : vector<8x32xf32>
    %6 = tpu.matmul %3, %5, %cst {dimension_numbers = #tpu.dot_dimension_numbers<[1], [0], [0], [1], [0, 0, 1, 1], [], []>} : vector<8x32xbf16>, vector<32x32xbf16>, vector<8x32xf32> -> vector<8x32xf32>
    %c0_5 = arith.constant 0 : index
    %c0_6 = arith.constant 0 : index
    %c0_7 = arith.constant 0 : index
    %7 = vector.load %arg6[%c0_5, %c0_6, %c0_7] : memref<1x1x32xf32, #tpu.memory_space<vmem>>, vector<1x1x32xf32>
    %8 = vector.shape_cast %7 : vector<1x1x32xf32> to vector<1x32xf32>
    %9 = vector.broadcast %8 : vector<1x32xf32> to vector<8x32xf32>
    %10 = arith.addf %6, %9 : vector<8x32xf32>
    %11 = arith.truncf %10 : vector<8x32xf32> to vector<8x32xbf16>
    %c0_8 = arith.constant 0 : index
    %c0_9 = arith.constant 0 : index
    %c0_10 = arith.constant 0 : index
    %c0_11 = arith.constant 0 : index
    %12 = vector.load %arg7[%c0_8, %c0_9, %c0_10, %c0_11] : memref<1x1x8x32xbf16, #tpu.memory_space<vmem>>, vector<1x1x8x32xbf16>
    %13 = vector.shape_cast %12 : vector<1x1x8x32xbf16> to vector<8x32xbf16>
    %14 = vector.shape_cast %11 : vector<8x32xbf16> to vector<1x1x8x32xbf16>
    tpu.vector_store %arg7[%c0_8, %c0_9, %c0_10, %c0_11], %14 {strides = array<i32>} : memref<1x1x8x32xbf16, #tpu.memory_space<vmem>>, vector<1x1x8x32xbf16>,
    return
  }
  func.func @transform_0(%arg0: i32, %arg1: i32, %arg2: i32) -> (i32, i32, i32) {
    %c0_i32 = arith.constant 0 : i32
    %c0_i32_0 = arith.constant 0 : i32
    return %arg0, %arg1, %c0_i32 : i32, i32, i32
  }
  func.func @transform_1(%arg0: i32, %arg1: i32, %arg2: i32) -> (i32, i32) {
    %c0_i32 = arith.constant 0 : i32
    %c0_i32_0 = arith.constant 0 : i32
    %c0_i32_1 = arith.constant 0 : i32
    return %c0_i32, %c0_i32_0 : i32, i32
  }
  func.func @transform_2(%arg0: i32, %arg1: i32, %arg2: i32) -> (i32, i32, i32) {
    %c0_i32 = arith.constant 0 : i32
    %c0_i32_0 = arith.constant 0 : i32
    %c0_i32_1 = arith.constant 0 : i32
    return %arg2, %c0_i32, %c0_i32_0 : i32, i32, i32
  }
  func.func @transform_3(%arg0: i32, %arg1: i32, %arg2: i32) -> (i32, i32, i32) {
    %c0_i32 = arith.constant 0 : i32
    %c0_i32_0 = arith.constant 0 : i32
    %c0_i32_1 = arith.constant 0 : i32
    return %arg2, %c0_i32, %c0_i32_0 : i32, i32, i32
  }
  func.func @transform_4(%arg0: i32, %arg1: i32, %arg2: i32) -> (i32, i32, i32, i32) {
    %c0_i32 = arith.constant 0 : i32
    %c0_i32_0 = arith.constant 0 : i32
    return %arg2, %arg0, %arg1, %c0_i32 : i32, i32, i32, i32
  }
}

</mosaic_0001>

<llo_original>
// kernel: tpu_custom_call.1
$region0: #{tpu_custom_call.1}
  #allocation0 [shape = 'u32[]', space=smem, size = 0x4, offset = 0x4, fixed_abs, tag = 'smem constant byte address 0x4 - core index']
  #allocation1 [shape = 'u32[144,128]{1,0:T(1,128)}', space=vmem, size = 0x12000, scoped, tag = 'internal scratch']
  #allocation2 [shape = 'bf16[8,32]{1,0:T(8,128)(2,1)}', space=vmem, size = 0x800, scoped, tag = 'scratch operand']
  %s0 = inlined_call_operand.hbm [shape: f32[2,16,32], index: 0, kind: input, shape index: {}]
  %s1 = inlined_call_operand.hbm [shape: f32[2,32], index: 1, kind: input, shape index: {}]
  %s2 = inlined_call_operand.hbm [shape: bf16[3,32,32], index: 2, kind: input, shape index: {}]
  %s3 = inlined_call_operand.vmem [shape: f32[3,1,32], index: 3, kind: input, shape index: {}]
  %s4 = inlined_call_operand.hbm [shape: bf16[3,2,16,32], index: 4, kind: output, shape index: {}]
  %s5 = sld [smem:[#allocation0]]
  $region65: #{tpu_custom_call.1} parent=0
    _
  %s7 = ssub.s32 1, %s5
  %s8 = scalar_select 0, %s7, %s5
  $region1: #{tpu_custom_call.1} parent=0
    #allocation3 [shape = 'u8[8192]{0}', space=vmem, size = 0x2000, scoped, tag = 'input window, operand 0']
    #allocation4 [shape = 's32[2]{0}', space=sflag, size = 0x8, scoped, tag = 'scoped memory for tpu_custom_call.1']
    #allocation5 [shape = 's32[2]{0}', space=sflag, size = 0x8, scoped, tag = 'scoped memory for tpu_custom_call.1']
    #allocation6 [shape = 'u8[1024]{0}', space=vmem, size = 0x400, scoped, tag = 'input window, operand 1, single buffered']
    #allocation7 [shape = 's32[1]{0}', space=sflag, size = 0x4, scoped, tag = 'scoped memory for tpu_custom_call.1']
    #allocation8 [shape = 'u8[16384]{0}', space=vmem, size = 0x4000, scoped, tag = 'input window, operand 2']
    #allocation9 [shape = 'u8[4096]{0}', space=vmem, size = 0x1000, scoped, tag = 'output window, operand 0']
    %9 = vsyncpa [#allocation4], 0
    %s10 = scalar_lea.sflag [#allocation4], 1
    %11 = vsyncpa %s10, 0
    %12 = vsyncpa [#allocation7], 0
    %13 = vsyncpa [#allocation5], 0
    %s14 = scalar_lea.sflag [#allocation5], 1
    %15 = vsyncpa %s14, 0
    loop: start=0, step=1, limit=14
    $region2: #{tpu_custom_call.1} parent=1 // loop_pre_header
      _
    $region3: #{tpu_custom_call.1} parent=1 // loop_header
      %s17 = sphi 0, %s21
      %p18 = scmp.ge.s32.totalorder %s17, 14
      %s24 = sphi 0, %s43
      %s25 = sphi 0, %s39
      %s26 = sphi 0, %s35
      %s27 = sphi 0, %s24
      %s28 = sphi 0, %s25
      %s29 = sphi 0, %s26
      %s30 = sphi 0, %s27
      %s31 = sphi 0, %s28
      %s32 = sphi 0, %s29
      %s48 = sphi 0, %s50
      %s51 = sphi 0, %s48
      %s52 = sphi 0, %s51
      %s68 = sphi 0, %s52
      %s72 = sphi 0, %s72
      %s74 = sphi 0, %s72
      %s75 = sphi 0, %s74
      %s89 = sphi 0, %s75
      %s95 = sphi 0, %s97
      %s98 = sphi 0, %s95
      %s99 = sphi 0, %s98
      %s115 = sphi 0, %s99
      %s121 = sphi 0, %s123
      %s124 = sphi 0, %s121
      %s125 = sphi 0, %s124
      %s141 = sphi 0, %s125
      %s151 = sphi 0, %s153
      %s154 = sphi 0, %s151
      %s155 = sphi 0, %s154
      %s171 = sphi 0, %s155
    $region4: #{tpu_custom_call.1} parent=1 // loop_header_branch
      %20 = sbr.rel (%p18) target = $region8
    $region5: #{tpu_custom_call.1} parent=1 // loop_body
      %s22 = ssub.s32 %s17, 1
      %s23 = ssub.s32 %s17, 2
      %s33 = sadd.s32 1, %s26
      %p34 = scmp.ge.s32.totalorder %s33, 3
      %s35 = scalar_select %p34, 0, %s33
      %s36 = sadd.s32 1, %s25
      %s37 = scalar_select %p34, %s36, %s25
      %p38 = scmp.ge.s32.totalorder %s37, 2
      %s39 = scalar_select %p38, 0, %s37
      %s40 = sadd.s32 1, %s24
      %s41 = scalar_select %p38, %s40, %s24
      %p42 = scmp.ge.s32.totalorder %s41, 2
      %s43 = scalar_select %p42, 0, %s41
      %s44 = ssub.s32 %s24, %s43
      %s45 = ssub.s32 %s25, %s39
      %s46 = sor.u32 %s44, %s45
      %p47 = scmp.eq.s32.totalorder %s46, 0
      %s49 = sadd.s32 %s48, 1
      %s50 = scalar_select %p47, %s48, %s49
      %p53 = pneg %p47
      %p54 = scmp.eq.s32.totalorder %s17, 11
      %p55 = por %p53, %p54
      %p56 = scmp.ne.s32.totalorder %s48, %s51
      %p57 = scmp.eq.s32.totalorder %s17, 0
      %p58 = por %p56, %p57
      %p59 = scmp.ne.s32.totalorder %s48, %s51
      %p60 = scmp.eq.s32.totalorder %s22, 11
      %p61 = por %p59, %p60
      %p62 = scmp.ne.s32.totalorder %s51, %s52
      %p63 = scmp.eq.s32.totalorder %s22, 0
      %p64 = por %p62, %p63
      %p65 = scmp.ne.s32.totalorder %s51, %s52
      %p66 = scmp.eq.s32.totalorder %s23, 11
      %p67 = por %p65, %p66
      %p69 = scmp.ne.s32.totalorder %s52, %s68
      %p70 = scmp.eq.s32.totalorder %s23, 0
      %p71 = por %p69, %p70
      %s73 = sadd.s32 %s72, 1
      %p76 = scmp.eq.s32.totalorder %s17, 11
      %p77 = scmp.ne.s32.totalorder %s72, %s74
      %p78 = scmp.eq.s32.totalorder %s17, 0
      %p79 = por %p77, %p78
      %p80 = scmp.ne.s32.totalorder %s72, %s74
      %p81 = scmp.eq.s32.totalorder %s22, 11
      %p82 = por %p80, %p81
      %p83 = scmp.ne.s32.totalorder %s74, %s75
      %p84 = scmp.eq.s32.totalorder %s22, 0
      %p85 = por %p83, %p84
      %p86 = scmp.ne.s32.totalorder %s74, %s75
      %p87 = scmp.eq.s32.totalorder %s23, 11
      %p88 = por %p86, %p87
      %p90 = scmp.ne.s32.totalorder %s75, %s89
      %p91 = scmp.eq.s32.totalorder %s23, 0
      %p92 = por %p90, %p91
      %s93 = ssub.s32 %s26, %s35
      %p94 = scmp.eq.s32.totalorder %s93, 0
      %s96 = sadd.s32 %s95, 1
      %s97 = scalar_select %p94, %s95, %s96
      %p100 = pneg %p94
      %p101 = scmp.eq.s32.totalorder %s17, 11
      %p102 = por %p100, %p101
      %p103 = scmp.ne.s32.totalorder %s95, %s98
      %p104 = scmp.eq.s32.totalorder %s17, 0
      %p105 = por %p103, %p104
      %p106 = scmp.ne.s32.totalorder %s95, %s98
      %p107 = scmp.eq.s32.totalorder %s22, 11
      %p108 = por %p106, %p107
      %p109 = scmp.ne.s32.totalorder %s98, %s99
      %p110 = scmp.eq.s32.totalorder %s22, 0
      %p111 = por %p109, %p110
      %p112 = scmp.ne.s32.totalorder %s98, %s99
      %p113 = scmp.eq.s32.totalorder %s23, 11
      %p114 = por %p112, %p113
      %p116 = scmp.ne.s32.totalorder %s99, %s115
      %p117 = scmp.eq.s32.totalorder %s23, 0
      %p118 = por %p116, %p117
      %s119 = ssub.s32 %s26, %s35
      %p120 = scmp.eq.s32.totalorder %s119, 0
      %s122 = sadd.s32 %s121, 1
      %s123 = scalar_select %p120, %s121, %s122
      %p126 = pneg %p120
      %p127 = scmp.eq.s32.totalorder %s17, 11
      %p128 = por %p126, %p127
      %p129 = scmp.ne.s32.totalorder %s121, %s124
      %p130 = scmp.eq.s32.totalorder %s17, 0
      %p131 = por %p129, %p130
      %p132 = scmp.ne.s32.totalorder %s121, %s124
      %p133 = scmp.eq.s32.totalorder %s22, 11
      %p134 = por %p132, %p133
      %p135 = scmp.ne.s32.totalorder %s124, %s125
      %p136 = scmp.eq.s32.totalorder %s22, 0
      %p137 = por %p135, %p136
      %p138 = scmp.ne.s32.totalorder %s124, %s125
      %p139 = scmp.eq.s32.totalorder %s23, 11
      %p140 = por %p138, %p139
      %p142 = scmp.ne.s32.totalorder %s125, %s141
      %p143 = scmp.eq.s32.totalorder %s23, 0
      %p144 = por %p142, %p143
      %s145 = ssub.s32 %s26, %s35
      %s146 = ssub.s32 %s24, %s43
      %s147 = sor.u32 %s145, %s146
      %s148 = ssub.s32 %s25, %s39
      %s149 = sor.u32 %s147, %s148
      %p150 = scmp.eq.s32.totalorder %s149, 0
      %s152 = sadd.s32 %s151, 1
      %s153 = scalar_select %p150, %s151, %s152
      %p156 = pneg %p150
      %p157 = scmp.eq.s32.totalorder %s17, 11
      %p158 = por %p156, %p157
      %p159 = scmp.ne.s32.totalorder %s151, %s154
      %p160 = scmp.eq.s32.totalorder %s17, 0
      %p161 = por %p159, %p160
      %p162 = scmp.ne.s32.totalorder %s151, %s154
      %p163 = scmp.eq.s32.totalorder %s22, 11
      %p164 = por %p162, %p163
      %p165 = scmp.ne.s32.totalorder %s154, %s155
      %p166 = scmp.eq.s32.totalorder %s22, 0
      %p167 = por %p165, %p166
      %p168 = scmp.ne.s32.totalorder %s154, %s155
      %p169 = scmp.eq.s32.totalorder %s23, 11
      %p170 = por %p168, %p169
      %p172 = scmp.ne.s32.totalorder %s155, %s171
      %p173 = scmp.eq.s32.totalorder %s23, 0
      %p174 = por %p172, %p173
      %p175 = scmp.le.s32.totalorder 1, %s17
      %p176 = scmp.lt.s32.totalorder %s17, 13
      %p177 = pnand %p175, %p176
      %p178 = pneg %p177
      // Predicated region
      $region9: #{tpu_custom_call.1} parent=5 // pred_check
        _
      $region10: #{tpu_custom_call.1} parent=5 // pred_check_branch
        %180 = sbr.rel (%p177) target = $region12
      $region11: #{tpu_custom_call.1} parent=5 // pred_region
        %s181 = ssub.s32 %s17, 1
        // Predicated region
        $region13: #{tpu_custom_call.1} parent=11 // pred_check
          %p182 = pneg %p85
        $region14: #{tpu_custom_call.1} parent=11 // pred_check_branch
          %184 = sbr.rel (%p182) target = $region16
        $region15: #{tpu_custom_call.1} parent=11 // pred_region
          %s186 = ssub.s32 32, 32
          %187 = vsyncadd [#allocation7], %s186
          %s189 = sshll.u32 [#allocation6], 4
          %s190 = int_to_ptr.vmem [resolvable:$true] %s189
          %192 = dma.hbm_to_vmem [thread:$0]  %s1, 32, %s190, [#allocation7]
        $region16: #{tpu_custom_call.1} parent=11 // pred_fallthru
          _
      $region12: #{tpu_custom_call.1} parent=5 // pred_fallthru
        _
      %p193 = scmp.lt.s32.totalorder %s17, 12
      // Predicated region
      $region17: #{tpu_custom_call.1} parent=5 // pred_check
        %p194 = pneg %p193
      $region18: #{tpu_custom_call.1} parent=5 // pred_check_branch
        %196 = sbr.rel (%p194) target = $region20
      $region19: #{tpu_custom_call.1} parent=5 // pred_region
        // Predicated region
        $region21: #{tpu_custom_call.1} parent=19 // pred_check
          %p197 = pneg %p58
        $region22: #{tpu_custom_call.1} parent=19 // pred_check_branch
          %199 = sbr.rel (%p197) target = $region24
        $region23: #{tpu_custom_call.1} parent=19 // pred_region
          %s200 = sand.u32 %s17, 1
          %s201 = scalar_lea.sflag [#allocation4], %s200
          %s202 = sand.u32 %s48, 1
          %s203 = smul.addr %s202, 8
          %s204 = scalar_lea.vmem [#allocation3], %s203
          %s206 = ssub.s32 128, 128
          %207 = vsyncadd %s201, %s206
          %s208 = smul.addr %s24, 2
          %s209 = sadd.s32 %s25, %s208
          %s210 = smul.addr %s209, 128
          %s211 = scalar_lea.hbm %s0, %s210
          %s213 = sshll.u32 %s204, 4
          %s214 = int_to_ptr.vmem [resolvable:$true] %s213
          %216 = dma.hbm_to_vmem [thread:$0]  %s211, 128, %s214, %s201
        $region24: #{tpu_custom_call.1} parent=19 // pred_fallthru
          _
        // Predicated region
        $region25: #{tpu_custom_call.1} parent=19 // pred_check
          %p217 = pneg %p105
        $region26: #{tpu_custom_call.1} parent=19 // pred_check_branch
          %219 = sbr.rel (%p217) target = $region28
        $region27: #{tpu_custom_call.1} parent=19 // pred_region
          %s220 = sand.u32 %s17, 1
          %s221 = scalar_lea.sflag [#allocation4], %s220
          %s222 = sand.u32 %s95, 1
          %s223 = smul.addr %s222, 16
          %s224 = scalar_lea.vmem [#allocation8], %s223
          %s226 = ssub.s32 256, 256
          %227 = vsyncadd %s221, %s226
          %s228 = smul.addr %s26, 4
          %s229 = smul.addr %s228, 64
          %s230 = scalar_lea.hbm %s2, %s229
          %s231 = sshll.u32 %s224, 4
          %s232 = int_to_ptr.vmem [resolvable:$true] %s231
          %237 = dma.hbm_to_vmem [thread:$0]  %s230, 256, %s232, %s221, 64, 64, 4
        $region28: #{tpu_custom_call.1} parent=19 // pred_fallthru
          _
        // Predicated region
        $region29: #{tpu_custom_call.1} parent=19 // pred_check
          %p238 = pneg %p131
        $region30: #{tpu_custom_call.1} parent=19 // pred_check_branch
          %240 = sbr.rel (%p238) target = $region32
        $region31: #{tpu_custom_call.1} parent=19 // pred_region
          %p241 = scmp.lt.s32.totalorder %s26, 2
          %s242 = scalar_select %p241, %s26, 2
          %s243 = scalar_lea.vmem %s3, %s242
        $region32: #{tpu_custom_call.1} parent=19 // pred_fallthru
          _
      $region20: #{tpu_custom_call.1} parent=5 // pred_fallthru
        _
      %p244 = scmp.le.s32.totalorder 1, %s17
      %p245 = scmp.lt.s32.totalorder %s17, 13
      %p246 = pnand %p244, %p245
      %p247 = pneg %p246
      // Predicated region
      $region33: #{tpu_custom_call.1} parent=5 // pred_check
        _
      $region34: #{tpu_custom_call.1} parent=5 // pred_check_branch
        %249 = sbr.rel (%p246) target = $region36
      $region35: #{tpu_custom_call.1} parent=5 // pred_region
        %s250 = ssub.s32 %s17, 1
        %s251 = sand.u32 %s22, 1
        %s252 = scalar_lea.sflag [#allocation4], %s251
        %s253 = sand.u32 %s51, 1
        %s254 = smul.addr %s253, 8
        %s255 = scalar_lea.vmem [#allocation3], %s254
        // Predicated region
        $region37: #{tpu_custom_call.1} parent=35 // pred_check
          %p256 = pneg %p64
        $region38: #{tpu_custom_call.1} parent=35 // pred_check_branch
          %258 = sbr.rel (%p256) target = $region40
        $region39: #{tpu_custom_call.1} parent=35 // pred_region
          %259 = dma.done %s252, 128
        $region40: #{tpu_custom_call.1} parent=35 // pred_fallthru
          _
        // Predicated region
        $region41: #{tpu_custom_call.1} parent=35 // pred_check
          %p260 = pneg %p85
        $region42: #{tpu_custom_call.1} parent=35 // pred_check_branch
          %262 = sbr.rel (%p260) target = $region44
        $region43: #{tpu_custom_call.1} parent=35 // pred_region
          %263 = dma.done [#allocation7], 32
        $region44: #{tpu_custom_call.1} parent=35 // pred_fallthru
          _
        %s264 = sand.u32 %s22, 1
        %s265 = scalar_lea.sflag [#allocation4], %s264
        %s266 = sand.u32 %s98, 1
        %s267 = smul.addr %s266, 16
        %s268 = scalar_lea.vmem [#allocation8], %s267
        // Predicated region
        $region45: #{tpu_custom_call.1} parent=35 // pred_check
          %p269 = pneg %p111
        $region46: #{tpu_custom_call.1} parent=35 // pred_check_branch
          %271 = sbr.rel (%p269) target = $region48
        $region47: #{tpu_custom_call.1} parent=35 // pred_region
          %272 = dma.done %s265, 256
        $region48: #{tpu_custom_call.1} parent=35 // pred_fallthru
          _
        %s273 = sand.u32 %s22, 1
        %s274 = scalar_lea.sflag [#allocation4], %s273
        %s275 = sand.u32 %s51, 1
        %s276 = smul.addr %s275, 8
        %s277 = scalar_lea.vmem [#allocation3], %s276
        %p278 = pneg %p64
        %p279 = pneg %p61
        %p280 = pneg %p85
        %p281 = pneg %p82
        %s282 = sand.u32 %s22, 1
        %s283 = scalar_lea.sflag [#allocation4], %s282
        %s284 = sand.u32 %s98, 1
        %s285 = smul.addr %s284, 16
        %s286 = scalar_lea.vmem [#allocation8], %s285
        %p287 = pneg %p111
        %p288 = pneg %p108
        %p289 = scmp.lt.s32.totalorder %s29, 2
        %s290 = scalar_select %p289, %s29, 2
        %s291 = scalar_lea.vmem %s3, %s290
        %p292 = pneg %p137
        %p293 = pneg %p134
        %p294 = pneg %p167
        %p295 = pneg %p164
        %s296 = sand.u32 %s154, 1
        %s297 = scalar_lea.sflag [#allocation5], %s296
        %s298 = sand.u32 %s154, 1
        %s299 = smul.addr %s298, 4
        %s300 = scalar_lea.vmem [#allocation9], %s299
        %p301 = scmp.lt.s32.totalorder %s29, 2
        %s302 = scalar_select %p301, %s29, 2
        %s303 = scalar_lea.vmem %s3, %s302
        %p305 = scmp.eq.s32.totalorder %s29, 0
        // Predicated region
        $region49: #{tpu_custom_call.1} parent=35 // pred_check
          %p306 = pneg %p305
        $region50: #{tpu_custom_call.1} parent=35 // pred_check_branch
          %308 = sbr.rel (%p306) target = $region52
        $region51: #{tpu_custom_call.1} parent=35 // pred_region
          %v309 = vld [vmem:[%s255] sm:$0xff]
          %v310 = vld [vmem:[#allocation6] sm:$0x3]
          %vm311 = vcmask 261120
          %v312 = vsel %vm311, %v309, 0.0
          %313 = vadd.xlane.f32.xlu0 %v312
          %v314 = vpop.xlane.xlu0 %313
          %v315 = vrcp.pop 32.0
          %v316 = vmul.f32 %v314, %v315
          %v317 = vsub.f32 %v309, %v316
          %v318 = vmul.f32 %v317, %v317
          %v319 = vsel %vm311, %v318, 0.0
          %320 = vadd.xlane.f32.xlu0 %v319
          %v321 = vpop.xlane.xlu0 %320
          %v322 = vmul.f32 %v321, %v315
          %v323 = vadd.f32 %v322, 1e-05
          %v324 = vrsqrt.pop %v323
          %v325 = vmul.f32 %v317, %v324
          %v326 = vlaneseq
          %v327 = vshrl.u32 %v326, 7
          %v328 = vsub.s32 0, %v327
          %v329 = vrot.slane %v310, %v328
          %v330 = vmul.f32 %v325, %v329
          %v331 = vlaneseq
          %v332 = vshrl.u32 %v331, 7
          %v333 = vsub.s32 1, %v332
          %v334 = vrot.slane %v310, %v333
          %v335 = vadd.f32 %v330, %v334
          %v336 = vpack.c.bf16 %v335, %v335
          %vm337 = vcmask 257024
          %338 = vst.msk [vmem:[#allocation2] sm:$0xf] %vm337, %v336
        $region52: #{tpu_custom_call.1} parent=35 // pred_fallthru
          _
        %v339 = vld [vmem:[#allocation2] sm:$0xf]
        %v340 = vld [vmem:[%s268] sm:$0xf]
        %v341 = vld [vmem:[%s268 + $0x4] sm:$0xf]
        %v342 = vld [vmem:[%s268 + $0x8] sm:$0xf]
        %v343 = vld [vmem:[%s268 + $0xc] sm:$0xf]
        %v344 = vld [vmem:[%s303] sm:$0x1]
        %v346 = vlaneseq
        %v347 = vshrl.u32 %v346, 7
        %v348 = vsub.s32 0, %v347
        %v349 = vrot.slane %v344, %v348
        %v355 = vunpack.c.l.b16 %v340
        %v356 = vunpack.c.l.b16 %v341
        %v357 = vunpack.c.l.b16 %v342
        %v358 = vunpack.c.l.b16 %v343
        %v359 = vpack.c.b16 %v356, %v355
        %v360 = vpack.c.b16 %v358, %v357
        %vm363 = vcmask 261120
        %v365 = vsel %vm363, %v339, 0
        %367 = vmatprep.subr.bf16.mxu0 0
        %368 = vmatpush1.bf16.msra.mxu0 0
        %369 = vmatprep.subr.bf16.mxu0 0
        %370 = vmatpush1.bf16.msra.mxu0 0
        %371 = vmatprep.subr.bf16.mxu0 0
        %372 = vmatpush1.bf16.msra.mxu0 0
        %373 = vmatprep.subr.bf16.mxu0 0
        %374 = vmatpush1.bf16.msra.mxu0 0
        %375 = vmatprep.subr.bf16.mxu0 0
        %376 = vmatpush1.bf16.msra.mxu0 0
        %377 = vmatprep.subr.bf16.mxu0 0
        %378 = vmatpush1.bf16.msra.mxu0 0
        %379 = vmatprep.subr.bf16.mxu0 0
        %380 = vmatpush1.bf16.msra.mxu0 %v360
        %381 = vmatprep.subr.bf16.mxu0 0
        %382 = vmatpush1.bf16.msra.mxu0 %v359
        %383 = vmatprep.subr.bf16.mxu0 0
        %384 = vmatpush2.bf16.msra.mxu0 0
        %385 = vmatprep.subr.bf16.mxu0 0
        %386 = vmatpush2.bf16.msra.mxu0 0
        %387 = vmatprep.subr.bf16.mxu0 0
        %388 = vmatpush2.bf16.msra.mxu0 0
        %389 = vmatprep.subr.bf16.mxu0 0
        %390 = vmatpush2.bf16.msra.mxu0 0
        %391 = vmatprep.subr.bf16.mxu0 0
        %392 = vmatpush2.bf16.msra.mxu0 0
        %393 = vmatprep.subr.bf16.mxu0 0
        %394 = vmatpush2.bf16.msra.mxu0 0
        %395 = vmatprep.subr.bf16.mxu0 0
        %396 = vmatpush2.bf16.msra.mxu0 0
        %397 = vmatprep.subr.bf16.mxu0 0
        %398 = vmatpush2.bf16.msra.mxu0 0
        %399 = vmatprep.mubr.bf16.mxu0 0
        %400 = vmatmul.mubr.bf16.gmra.mxu0 %v365
        %v401 = vpop.f32.mrf.mxu0
        %v402 = vadd.f32 %v349, %v401
        %v403 = vpop.f32.mrf.mxu0
        %v404 = vpop.f32.mrf.mxu0
        %v405 = vpop.f32.mrf.mxu0
        %406 = vdwg.mxu0
        %v407 = vpack.c.bf16 %v402, %v402
        %vm408 = vcmask 257024
        %409 = vst.msk [vmem:[%s300] sm:$0xf] %vm408, %v407
        %s410 = sand.u32 %s154, 1
        %s411 = scalar_lea.sflag [#allocation5], %s410
        %s412 = sand.u32 %s154, 1
        %s413 = smul.addr %s412, 4
        %s414 = scalar_lea.vmem [#allocation9], %s413
        // Predicated region
        $region53: #{tpu_custom_call.1} parent=35 // pred_check
          %p415 = pneg %p164
        $region54: #{tpu_custom_call.1} parent=35 // pred_check_branch
          %417 = sbr.rel (%p415) target = $region56
        $region55: #{tpu_custom_call.1} parent=35 // pred_region
          %s419 = ssub.s32 64, 64
          %420 = vsyncadd %s411, %s419
          %s421 = smul.addr %s27, 2
          %s422 = sadd.s32 %s28, %s421
          %s423 = smul.addr %s29, 4
          %s424 = sadd.s32 %s422, %s423
          %s425 = smul.addr %s424, 64
          %s426 = scalar_lea.hbm %s4, %s425
          %s428 = sshll.u32 %s414, 4
          %s429 = int_to_ptr.vmem [resolvable:$true] %s428
          %431 = dma.vmem_to_hbm [thread:$0]  %s429, 64, %s426, %s411
        $region56: #{tpu_custom_call.1} parent=35 // pred_fallthru
          _
      $region36: #{tpu_custom_call.1} parent=5 // pred_fallthru
        _
      %p432 = scmp.le.s32.totalorder 2, %s17
      // Predicated region
      $region57: #{tpu_custom_call.1} parent=5 // pred_check
        %p433 = pneg %p432
      $region58: #{tpu_custom_call.1} parent=5 // pred_check_branch
        %435 = sbr.rel (%p433) target = $region60
      $region59: #{tpu_custom_call.1} parent=5 // pred_region
        %s436 = ssub.s32 %s17, 2
        // Predicated region
        $region61: #{tpu_custom_call.1} parent=59 // pred_check
          %p437 = pneg %p170
        $region62: #{tpu_custom_call.1} parent=59 // pred_check_branch
          %439 = sbr.rel (%p437) target = $region64
        $region63: #{tpu_custom_call.1} parent=59 // pred_region
          %s440 = sand.u32 %s155, 1
          %s441 = scalar_lea.sflag [#allocation5], %s440
          %s442 = sand.u32 %s155, 1
          %s443 = smul.addr %s442, 4
          %s444 = scalar_lea.vmem [#allocation9], %s443
          %445 = dma.done %s441, 64
        $region64: #{tpu_custom_call.1} parent=59 // pred_fallthru
          _
      $region60: #{tpu_custom_call.1} parent=5 // pred_fallthru
        _
    $region6: #{tpu_custom_call.1} parent=1 // loop_footer
      %s21 = sadd.s32 1, %s17
    $region7: #{tpu_custom_call.1} parent=1 // loop_footer_branch
      %16 = sbr.rel target = $region3
    $region8: #{tpu_custom_call.1} parent=1 // loop_exit
      _
    %446 = vsyncpa [#allocation4], 1
    %s447 = scalar_lea.sflag [#allocation4], 1
    %448 = vsyncpa %s447, 1
    %449 = vsyncpa [#allocation7], 1
    %450 = vsyncpa [#allocation5], 1
    %s451 = scalar_lea.sflag [#allocation5], 1
    %452 = vsyncpa %s451, 1

</llo_original>
